<compile_context>
chip_gen: v6e
topology: v6e:2x2x1
jax: 0.10.0
libtpu: 0.0.40
codegen_flags: <defaults>
</compile_context>

<pallas_src>
import functools

import jax
import jax.numpy as jnp
from jax.experimental import pallas as pl
from jax.experimental.pallas import tpu as pltpu

LANE = 128
SUBLANE = 8


def _round_up(n, m):
    return ((n + m - 1) // m) * m


def relu2_kernel(x_ref, w1_ref, b1_ref, w2_ref, b2_ref, o_ref):
    # fc1 + ReLU  (MXU matmul, f32 accumulate; bias/ReLU on VPU in f32)
    h = jnp.dot(x_ref[...], w1_ref[...], preferred_element_type=jnp.float32)
    h = jnp.maximum(h + b1_ref[...].astype(jnp.float32), 0.0)
    # fc2 + ReLU   (h stays f32; cast only at the dot input if weights are narrower)
    y = jnp.dot(h.astype(w2_ref.dtype), w2_ref[...],
                preferred_element_type=jnp.float32)
    y = jnp.maximum(y + b2_ref[...].astype(jnp.float32), 0.0)
    o_ref[...] = y.astype(o_ref.dtype)   # lane-dense (TILE_B, 128) unmasked store


@functools.partial(jax.jit, static_argnames=("num_actions", "tile_b"))
def relu2_forward(x, w1, b1, w2, b2, *, num_actions, tile_b=128):
    """x: (B, K).  w1:(K,Hp) b1:(1,Hp) w2:(Hp,Ap) b2:(1,Ap), Hp/Ap multiples of 128.

    Returns (B, num_actions): kernel computes the lane-padded (Bp, Ap) result,
    wrapper slices back to logical shape.
    """
    B, K = x.shape
    H = w1.shape[1]
    A = w2.shape[1]
    assert H % LANE == 0 and A % LANE == 0, "pad params with pad_params() first"

    # Batch tiling: round batch to sublane multiple, tile it, pad with zero rows.
    tb = min(tile_b, _round_up(B, SUBLANE))
    Bp = _round_up(B, tb)
    if Bp != B:
        x = jnp.pad(x, ((0, Bp - B), (0, 0)))

    grid = (Bp // tb,)
    itemsize = jnp.dtype(x.dtype).itemsize
    flops = 2 * Bp * (K * H + H * A)
    bytes_accessed = (x.size + w1.size + b1.size + w2.size + b2.size
                      + Bp * A) * itemsize

    out = pl.pallas_call(
        relu2_kernel,
        out_shape=jax.ShapeDtypeStruct((Bp, A), x.dtype),
        grid_spec=pltpu.PrefetchScalarGridSpec(
            num_scalar_prefetch=0,
            grid=grid,
            in_specs=[
                pl.BlockSpec((tb, K), lambda i: (i, 0)),   # x tile per grid step
                pl.BlockSpec((K, H), lambda i: (0, 0)),    # W1 resident in VMEM
                pl.BlockSpec((1, H), lambda i: (0, 0)),    # b1 resident
                pl.BlockSpec((H, A), lambda i: (0, 0)),    # W2 resident
                pl.BlockSpec((1, A), lambda i: (0, 0)),    # b2 resident
            ],
            out_specs=pl.BlockSpec((tb, A), lambda i: (i, 0)),
        ),
        compiler_params=pltpu.CompilerParams(
            dimension_semantics=("parallel",),             # shard tiles across TCs (v7x)
        ),
        cost_estimate=pl.CostEstimate(
            flops=flops, transcendentals=0, bytes_accessed=bytes_accessed),
    )(x, w1, b1, w2, b2)

    return out[:B, :num_actions]


def init_params(key, in_channels, num_actions, num_hidden=200, dtype=jnp.float32):
    """Deterministic init mimicking torch.nn.Linear default U(-1/sqrt(fan_in), +).
    Weights stored transposed vs PyTorch: (in, out), so the kernel does x @ W."""
    k1, k2, k3, k4 = jax.random.split(key, 4)
    bound1 = 1.0 / jnp.sqrt(in_channels)
    bound2 = 1.0 / jnp.sqrt(num_hidden)
    w1 = jax.random.uniform(k1, (in_channels, num_hidden), dtype, -bound1, bound1)
    b1 = jax.random.uniform(k2, (1, num_hidden), dtype, -bound1, bound1)
    w2 = jax.random.uniform(k3, (num_hidden, num_actions), dtype, -bound2, bound2)
    b2 = jax.random.uniform(k4, (1, num_actions), dtype, -bound2, bound2)
    return w1, b1, w2, b2


def pad_params(w1, b1, w2, b2):
    """Zero-pad hidden and action dims to multiples of 128 (once, at init).

    Padding is exact: padded hidden columns produce relu(0 + 0) = 0 and padded
    W2 rows/columns are zero, so the sliced output equals the unpadded math.
    """
    H = w1.shape[1]
    A = w2.shape[1]
    Hp = _round_up(H, LANE)   # 200 -> 256
    Ap = _round_up(A, LANE)   # 4   -> 128
    w1p = jnp.pad(w1, ((0, 0), (0, Hp - H)))
    b1p = jnp.pad(b1, ((0, 0), (0, Hp - H)))
    w2p = jnp.pad(w2, ((0, Hp - H), (0, Ap - A)))
    b2p = jnp.pad(b2, ((0, 0), (0, Ap - A)))
    return w1p, b1p, w2p, b2p


if __name__ == "__main__":
    in_channels, num_actions, num_hidden = 32, 4, 200

    key = jax.random.PRNGKey(0)
    kx, kp = jax.random.split(key)
    w1, b1, w2, b2 = init_params(kp, in_channels, num_actions, num_hidden)
    w1p, b1p, w2p, b2p = pad_params(w1, b1, w2, b2)

    def ref_fn(x):
        return jnp.maximum(jnp.maximum(x @ w1 + b1, 0.0) @ w2 + b2, 0.0)

    # batch=8: single grid step.  batch=512: 4 parallel batch tiles of 128.
    for batch in (8, 512):
        x = jax.random.normal(jax.random.fold_in(kx, batch),
                              (batch, in_channels), jnp.float32)
        out = relu2_forward(x, w1p, b1p, w2p, b2p, num_actions=num_actions)
        jax.block_until_ready(out)

        ref = ref_fn(x)
        assert out.shape == (batch, num_actions)
        assert jnp.allclose(out, ref, atol=1e-5, rtol=1e-5)

    print("KERNEL_OK")
</pallas_src>

<mosaic_0001>
module attributes {stable_mosaic.version = 11 : i64} {
  func.func @relu2_kernel(%arg0: i32, %arg1: memref<8x32xf32, #tpu.memory_space<vmem>>, %arg2: memref<32x256xf32, #tpu.memory_space<vmem>>, %arg3: memref<1x256xf32, #tpu.memory_space<vmem>>, %arg4: memref<256x128xf32, #tpu.memory_space<vmem>>, %arg5: memref<1x128xf32, #tpu.memory_space<vmem>>, %arg6: memref<8x128xf32, #tpu.memory_space<vmem>>) attributes {dimension_semantics = [#tpu.dimension_semantics<parallel>], iteration_bounds = array<i64: 1>, scalar_prefetch = 0 : i64, scratch_operands = 0 : i64, tpu.core_type = #tpu.core_type<tc>, window_params = [{transform_indices = @transform_0, window_bounds = array<i64: 8, 32>}, {pipeline_mode = #tpu.pipeline_mode<synchronous>, transform_indices = @transform_1, window_bounds = array<i64: 32, 256>}, {pipeline_mode = #tpu.pipeline_mode<synchronous>, transform_indices = @transform_2, window_bounds = array<i64: 1, 256>}, {pipeline_mode = #tpu.pipeline_mode<synchronous>, transform_indices = @transform_3, window_bounds = array<i64: 256, 128>}, {pipeline_mode = #tpu.pipeline_mode<synchronous>, transform_indices = @transform_4, window_bounds = array<i64: 1, 128>}, {transform_indices = @transform_5, window_bounds = array<i64: 8, 128>}]} {
    %c0 = arith.constant 0 : index
    %c0_0 = arith.constant 0 : index
    %0 = vector.load %arg1[%c0, %c0_0] : memref<8x32xf32, #tpu.memory_space<vmem>>, vector<8x32xf32>
    %c0_1 = arith.constant 0 : index
    %c0_2 = arith.constant 0 : index
    %1 = vector.load %arg2[%c0_1, %c0_2] : memref<32x256xf32, #tpu.memory_space<vmem>>, vector<32x256xf32>
    %cst = arith.constant dense<0.000000e+00> : vector<8x256xf32>
    %2 = tpu.matmul %0, %1, %cst {dimension_numbers = #tpu.dot_dimension_numbers<[1], [0], [0], [1], [0, 0, 1, 1], [], []>} : vector<8x32xf32>, vector<32x256xf32>, vector<8x256xf32> -> vector<8x256xf32>
    %c0_3 = arith.constant 0 : index
    %c0_4 = arith.constant 0 : index
    %3 = vector.load %arg3[%c0_3, %c0_4] : memref<1x256xf32, #tpu.memory_space<vmem>>, vector<1x256xf32>
    %4 = vector.broadcast %3 : vector<1x256xf32> to vector<8x256xf32>
    %5 = arith.addf %2, %4 : vector<8x256xf32>
    %cst_5 = arith.constant 0.000000e+00 : f32
    %6 = vector.broadcast %cst_5 : f32 to vector<8x256xf32>
    %7 = arith.maximumf %5, %6 : vector<8x256xf32>
    %c0_6 = arith.constant 0 : index
    %c0_7 = arith.constant 0 : index
    %8 = vector.load %arg4[%c0_6, %c0_7] : memref<256x128xf32, #tpu.memory_space<vmem>>, vector<256x128xf32>
    %cst_8 = arith.constant dense<0.000000e+00> : vector<8x128xf32>
    %9 = tpu.matmul %7, %8, %cst_8 {dimension_numbers = #tpu.dot_dimension_numbers<[1], [0], [0], [1], [0, 0, 1, 1], [], []>} : vector<8x256xf32>, vector<256x128xf32>, vector<8x128xf32> -> vector<8x128xf32>
    %c0_9 = arith.constant 0 : index
    %c0_10 = arith.constant 0 : index
    %10 = vector.load %arg5[%c0_9, %c0_10] : memref<1x128xf32, #tpu.memory_space<vmem>>, vector<1x128xf32>
    %11 = vector.broadcast %10 : vector<1x128xf32> to vector<8x128xf32>
    %12 = arith.addf %9, %11 : vector<8x128xf32>
    %cst_11 = arith.constant 0.000000e+00 : f32
    %13 = vector.broadcast %cst_11 : f32 to vector<8x128xf32>
    %14 = arith.maximumf %12, %13 : vector<8x128xf32>
    %c0_12 = arith.constant 0 : index
    %c0_13 = arith.constant 0 : index
    %15 = vector.load %arg6[%c0_12, %c0_13] : memref<8x128xf32, #tpu.memory_space<vmem>>, vector<8x128xf32>
    tpu.vector_store %arg6[%c0_12, %c0_13], %14 {strides = array<i32>} : memref<8x128xf32, #tpu.memory_space<vmem>>, vector<8x128xf32>,
    return
  }
  func.func @transform_0(%arg0: i32) -> (i32, i32) {
    %c0_i32 = arith.constant 0 : i32
    %c0_i32_0 = arith.constant 0 : i32
    return %arg0, %c0_i32 : i32, i32
  }
  func.func @transform_1(%arg0: i32) -> (i32, i32) {
    %c0_i32 = arith.constant 0 : i32
    %c0_i32_0 = arith.constant 0 : i32
    %c0_i32_1 = arith.constant 0 : i32
    return %c0_i32, %c0_i32_0 : i32, i32
  }
  func.func @transform_2(%arg0: i32) -> (i32, i32) {
    %c0_i32 = arith.constant 0 : i32
    %c0_i32_0 = arith.constant 0 : i32
    %c0_i32_1 = arith.constant 0 : i32
    return %c0_i32, %c0_i32_0 : i32, i32
  }
  func.func @transform_3(%arg0: i32) -> (i32, i32) {
    %c0_i32 = arith.constant 0 : i32
    %c0_i32_0 = arith.constant 0 : i32
    %c0_i32_1 = arith.constant 0 : i32
    return %c0_i32, %c0_i32_0 : i32, i32
  }
  func.func @transform_4(%arg0: i32) -> (i32, i32) {
    %c0_i32 = arith.constant 0 : i32
    %c0_i32_0 = arith.constant 0 : i32
    %c0_i32_1 = arith.constant 0 : i32
    return %c0_i32, %c0_i32_0 : i32, i32
  }
  func.func @transform_5(%arg0: i32) -> (i32, i32) {
    %c0_i32 = arith.constant 0 : i32
    %c0_i32_0 = arith.constant 0 : i32
    return %arg0, %c0_i32 : i32, i32
  }
}

</mosaic_0001>

<llo_original>
// kernel: relu2_forward.1
$region0: #{relu2_forward.1}
  #allocation0 [shape = 'u32[]', space=smem, size = 0x4, offset = 0x4, fixed_abs, tag = 'smem constant byte address 0x4 - core index']
  #allocation1 [shape = 'u32[144,128]{1,0:T(1,128)}', space=vmem, size = 0x12000, scoped, tag = 'internal scratch']
  %s0 = inlined_call_operand.hbm [shape: f32[8,32], index: 0, kind: input, shape index: {}]
  %s1 = inlined_call_operand.hbm [shape: f32[32,256], index: 1, kind: input, shape index: {}]
  %s2 = inlined_call_operand.vmem [shape: f32[1,256], index: 2, kind: input, shape index: {}]
  %s3 = inlined_call_operand.hbm [shape: f32[256,128], index: 3, kind: input, shape index: {}]
  %s4 = inlined_call_operand.vmem [shape: f32[1,128], index: 4, kind: input, shape index: {}]
  %s5 = inlined_call_operand.vmem [shape: f32[8,128], index: 5, kind: output, shape index: {}]
  %s6 = sld [smem:[#allocation0]]
  $region42: #{relu2_forward.1} parent=0
    _
  %s8 = ssub.s32 1, %s6
  %s9 = scalar_select 0, %s8, %s6
  $region1: #{relu2_forward.1} parent=0
    #allocation2 [shape = 'u8[4096]{0}', space=vmem, size = 0x1000, scoped, tag = 'input window, operand 0, single buffered']
    #allocation3 [shape = 's32[1]{0}', space=sflag, size = 0x4, scoped, tag = 'scoped memory for relu2_forward.1']
    #allocation4 [shape = 'u8[32768]{0}', space=vmem, size = 0x8000, scoped, tag = 'input window, operand 1, single buffered']
    #allocation5 [shape = 's32[1]{0}', space=sflag, size = 0x4, scoped, tag = 'scoped memory for relu2_forward.1']
    #allocation6 [shape = 'u8[131072]{0}', space=vmem, size = 0x20000, scoped, tag = 'input window, operand 3, single buffered']
    %10 = vsyncpa [#allocation3], 0
    %11 = vsyncpa [#allocation5], 0
    // Predicated region
    $region2: #{relu2_forward.1} parent=1 // pred_check
      _
    $region3: #{relu2_forward.1} parent=1 // pred_check_branch
      %13 = sbr.rel (0) target = $region5
    $region4: #{relu2_forward.1} parent=1 // pred_region
      %s15 = ssub.s32 128, 128
      %16 = vsyncadd [#allocation3], %s15
      %s18 = sshll.u32 [#allocation2], 4
      %s19 = int_to_ptr.vmem [resolvable:$true] %s18
      %21 = dma.hbm_to_vmem [thread:$0]  %s0, 128, %s19, [#allocation3]
    $region5: #{relu2_forward.1} parent=1 // pred_fallthru
      _
    // Predicated region
    $region6: #{relu2_forward.1} parent=1 // pred_check
      _
    $region7: #{relu2_forward.1} parent=1 // pred_check_branch
      %23 = sbr.rel (0) target = $region9
    $region8: #{relu2_forward.1} parent=1 // pred_region
      %s25 = ssub.s32 1024, 1024
      %26 = vsyncadd [#allocation5], %s25
      %s27 = sshll.u32 [#allocation4], 4
      %s28 = int_to_ptr.vmem [resolvable:$true] %s27
      %33 = dma.hbm_to_vmem [thread:$0]  %s1, 1024, %s28, [#allocation5], 256, 256, 16
    $region9: #{relu2_forward.1} parent=1 // pred_fallthru
      _
    // Predicated region
    $region10: #{relu2_forward.1} parent=1 // pred_check
      _
    $region11: #{relu2_forward.1} parent=1 // pred_check_branch
      %35 = sbr.rel (0) target = $region13
    $region12: #{relu2_forward.1} parent=1 // pred_region
      _
    $region13: #{relu2_forward.1} parent=1 // pred_fallthru
      _
    // Predicated region
    $region14: #{relu2_forward.1} parent=1 // pred_check
      _
    $region15: #{relu2_forward.1} parent=1 // pred_check_branch
      %37 = sbr.rel (0) target = $region17
    $region16: #{relu2_forward.1} parent=1 // pred_region
      %s39 = ssub.s32 4096, 4096
      %40 = vsyncadd [#allocation5], %s39
      %s41 = sshll.u32 [#allocation6], 4
      %s42 = int_to_ptr.vmem [resolvable:$true] %s41
      %47 = dma.hbm_to_vmem [thread:$0]  %s3, 4096, %s42, [#allocation5], 128, 128, 8
    $region17: #{relu2_forward.1} parent=1 // pred_fallthru
      _
    // Predicated region
    $region18: #{relu2_forward.1} parent=1 // pred_check
      _
    $region19: #{relu2_forward.1} parent=1 // pred_check_branch
      %49 = sbr.rel (0) target = $region21
    $region20: #{relu2_forward.1} parent=1 // pred_region
      _
    $region21: #{relu2_forward.1} parent=1 // pred_fallthru
      _
    // Predicated region
    $region22: #{relu2_forward.1} parent=1 // pred_check
      _
    $region23: #{relu2_forward.1} parent=1 // pred_check_branch
      %51 = sbr.rel (0) target = $region25
    $region24: #{relu2_forward.1} parent=1 // pred_region
      %52 = dma.done [#allocation3], 128
    $region25: #{relu2_forward.1} parent=1 // pred_fallthru
      _
    // Predicated region
    $region26: #{relu2_forward.1} parent=1 // pred_check
      _
    $region27: #{relu2_forward.1} parent=1 // pred_check_branch
      %54 = sbr.rel (0) target = $region29
    $region28: #{relu2_forward.1} parent=1 // pred_region
      %55 = dma.done [#allocation5], 1024
    $region29: #{relu2_forward.1} parent=1 // pred_fallthru
      _
    // Predicated region
    $region30: #{relu2_forward.1} parent=1 // pred_check
      _
    $region31: #{relu2_forward.1} parent=1 // pred_check_branch
      %57 = sbr.rel (0) target = $region33
    $region32: #{relu2_forward.1} parent=1 // pred_region
      %58 = dma.done [#allocation5], 4096
    $region33: #{relu2_forward.1} parent=1 // pred_fallthru
      _
    %v59 = vld [vmem:[#allocation2] sm:$0xff]
    %v60 = vld [vmem:[#allocation4] sm:$0xff]
    %v61 = vld [vmem:[#allocation4 + $0x8] sm:$0xff]
    %v62 = vld [vmem:[#allocation4 + $0x10] sm:$0xff]
    %v63 = vld [vmem:[#allocation4 + $0x18] sm:$0xff]
    %v64 = vld [vmem:[#allocation4 + $0x20] sm:$0xff]
    %v65 = vld [vmem:[#allocation4 + $0x28] sm:$0xff]
    %v66 = vld [vmem:[#allocation4 + $0x30] sm:$0xff]
    %v67 = vld [vmem:[#allocation4 + $0x38] sm:$0xff]
    %v68 = vld [vmem:[%s2] sm:$0x3]
    %v70 = vlaneseq
    %v71 = vshrl.u32 %v70, 7
    %v72 = vsub.s32 0, %v71
    %v73 = vrot.slane %v68, %v72
    %v74 = vlaneseq
    %v75 = vshrl.u32 %v74, 7
    %v76 = vsub.s32 1, %v75
    %v77 = vrot.slane %v68, %v76
    %vm80 = vcmask 261120
    %v82 = vsel %vm80, %v59, 0
    %84 = vmatprep.subr.mxu0 0.0
    %85 = vmatpush1.msra.mxu0 0.0
    %86 = vmatprep.subr.mxu0 0.0
    %87 = vmatpush1.msra.mxu0 0.0
    %88 = vmatprep.subr.mxu0 0.0
    %89 = vmatpush1.msra.mxu0 0.0
    %90 = vmatprep.subr.mxu0 0.0
    %91 = vmatpush1.msra.mxu0 0.0
    %92 = vmatprep.subr.mxu0 0.0
    %93 = vmatpush1.msra.mxu0 0.0
    %94 = vmatprep.subr.mxu0 0.0
    %95 = vmatpush1.msra.mxu0 0.0
    %96 = vmatprep.subr.mxu0 0.0
    %97 = vmatpush1.msra.mxu0 0.0
    %98 = vmatprep.subr.mxu0 0.0
    %99 = vmatpush1.msra.mxu0 0.0
    %100 = vmatprep.subr.mxu0 0.0
    %101 = vmatpush1.msra.mxu0 0.0
    %102 = vmatprep.subr.mxu0 0.0
    %103 = vmatpush1.msra.mxu0 0.0
    %104 = vmatprep.subr.mxu0 0.0
    %105 = vmatpush1.msra.mxu0 0.0
    %106 = vmatprep.subr.mxu0 0.0
    %107 = vmatpush1.msra.mxu0 0.0
    %108 = vmatprep.subr.mxu0 %v67
    %109 = vmatpush1.msra.mxu0 %v66
    %110 = vmatprep.subr.mxu0 %v65
    %111 = vmatpush1.msra.mxu0 %v64
    %112 = vmatprep.subr.mxu0 %v63
    %113 = vmatpush1.msra.mxu0 %v62
    %114 = vmatprep.subr.mxu0 %v61
    %115 = vmatpush1.msra.mxu0 %v60
    %116 = vmatprep.subr.mxu0 0.0
    %117 = vmatpush2.msra.mxu0 0.0
    %118 = vmatprep.subr.mxu0 0.0
    %119 = vmatpush2.msra.mxu0 0.0
    %120 = vmatprep.subr.mxu0 0.0
    %121 = vmatpush2.msra.mxu0 0.0
    %122 = vmatprep.subr.mxu0 0.0
    %123 = vmatpush2.msra.mxu0 0.0
    %124 = vmatprep.subr.mxu0 0.0
    %125 = vmatpush2.msra.mxu0 0.0
    %126 = vmatprep.subr.mxu0 0.0
    %127 = vmatpush2.msra.mxu0 0.0
    %128 = vmatprep.subr.mxu0 0.0
    %129 = vmatpush2.msra.mxu0 0.0
    %130 = vmatprep.subr.mxu0 0.0
    %131 = vmatpush2.msra.mxu0 0.0
    %132 = vmatprep.subr.mxu0 0.0
    %133 = vmatpush2.msra.mxu0 0.0
    %134 = vmatprep.subr.mxu0 0.0
    %135 = vmatpush2.msra.mxu0 0.0
    %136 = vmatprep.subr.mxu0 0.0
    %137 = vmatpush2.msra.mxu0 0.0
    %138 = vmatprep.subr.mxu0 0.0
    %139 = vmatpush2.msra.mxu0 0.0
    %140 = vmatprep.subr.mxu0 0.0
    %141 = vmatpush2.msra.mxu0 0.0
    %142 = vmatprep.subr.mxu0 0.0
    %143 = vmatpush2.msra.mxu0 0.0
    %144 = vmatprep.subr.mxu0 0.0
    %145 = vmatpush2.msra.mxu0 0.0
    %146 = vmatprep.subr.mxu0 0.0
    %147 = vmatpush2.msra.mxu0 0.0
    %148 = vmatprep.mubr.f32.mxu0 0.0
    %149 = vmatmul.mubr.f32.gmra.mxu0 %v82
    %v150 = vpop.f32.mrf.mxu0
    %v151 = vadd.f32 %v73, %v150
    %v152 = vpop.f32.mrf.mxu0
    %v153 = vadd.f32 %v77, %v152
    %154 = vdwg.mxu0
    %v155 = vmax.f32 %v151, 0.0
    %v156 = vmax.f32 %v153, 0.0
    %v157 = vld [vmem:[#allocation6] sm:$0xff]
    %v158 = vld [vmem:[#allocation6 + $0x8] sm:$0xff]
    %v159 = vld [vmem:[#allocation6 + $0x10] sm:$0xff]
    %v160 = vld [vmem:[#allocation6 + $0x18] sm:$0xff]
    %v161 = vld [vmem:[#allocation6 + $0x20] sm:$0xff]
    %v162 = vld [vmem:[#allocation6 + $0x28] sm:$0xff]
    %v163 = vld [vmem:[#allocation6 + $0x30] sm:$0xff]
    %v164 = vld [vmem:[#allocation6 + $0x38] sm:$0xff]
    %v165 = vld [vmem:[#allocation6 + $0x40] sm:$0xff]
    %v166 = vld [vmem:[#allocation6 + $0x48] sm:$0xff]
    %v167 = vld [vmem:[#allocation6 + $0x50] sm:$0xff]
    %v168 = vld [vmem:[#allocation6 + $0x58] sm:$0xff]
    %v169 = vld [vmem:[#allocation6 + $0x60] sm:$0xff]
    %v170 = vld [vmem:[#allocation6 + $0x68] sm:$0xff]
    %v171 = vld [vmem:[#allocation6 + $0x70] sm:$0xff]
    %v172 = vld [vmem:[#allocation6 + $0x78] sm:$0xff]
    %v173 = vld [vmem:[#allocation6 + $0x80] sm:$0xff]
    %v174 = vld [vmem:[#allocation6 + $0x88] sm:$0xff]
    %v175 = vld [vmem:[#allocation6 + $0x90] sm:$0xff]
    %v176 = vld [vmem:[#allocation6 + $0x98] sm:$0xff]
    %v177 = vld [vmem:[#allocation6 + $0xa0] sm:$0xff]
    %v178 = vld [vmem:[#allocation6 + $0xa8] sm:$0xff]
    %v179 = vld [vmem:[#allocation6 + $0xb0] sm:$0xff]
    %v180 = vld [vmem:[#allocation6 + $0xb8] sm:$0xff]
    %v181 = vld [vmem:[#allocation6 + $0xc0] sm:$0xff]
    %v182 = vld [vmem:[#allocation6 + $0xc8] sm:$0xff]
    %v183 = vld [vmem:[#allocation6 + $0xd0] sm:$0xff]
    %v184 = vld [vmem:[#allocation6 + $0xd8] sm:$0xff]
    %v185 = vld [vmem:[#allocation6 + $0xe0] sm:$0xff]
    %v186 = vld [vmem:[#allocation6 + $0xe8] sm:$0xff]
    %v187 = vld [vmem:[#allocation6 + $0xf0] sm:$0xff]
    %v188 = vld [vmem:[#allocation6 + $0xf8] sm:$0xff]
    %v189 = vld [vmem:[%s4] sm:$0x1]
    %v191 = vlaneseq
    %v192 = vshrl.u32 %v191, 7
    %v193 = vsub.s32 0, %v192
    %v194 = vrot.slane %v189, %v193
    %196 = vmatprep.subr.mxu0 0.0
    %197 = vmatpush1.msra.mxu0 %v172
    %198 = vmatprep.subr.mxu0 0.0
    %199 = vmatpush1.msra.mxu0 %v171
    %200 = vmatprep.subr.mxu0 0.0
    %201 = vmatpush1.msra.mxu0 %v170
    %202 = vmatprep.subr.mxu0 0.0
    %203 = vmatpush1.msra.mxu0 %v169
    %204 = vmatprep.subr.mxu0 0.0
    %205 = vmatpush1.msra.mxu0 %v168
    %206 = vmatprep.subr.mxu0 0.0
    %207 = vmatpush1.msra.mxu0 %v167
    %208 = vmatprep.subr.mxu0 0.0
    %209 = vmatpush1.msra.mxu0 %v166
    %210 = vmatprep.subr.mxu0 0.0
    %211 = vmatpush1.msra.mxu0 %v165
    %212 = vmatprep.subr.mxu0 0.0
    %213 = vmatpush1.msra.mxu0 %v164
    %214 = vmatprep.subr.mxu0 0.0
    %215 = vmatpush1.msra.mxu0 %v163
    %216 = vmatprep.subr.mxu0 0.0
    %217 = vmatpush1.msra.mxu0 %v162
    %218 = vmatprep.subr.mxu0 0.0
    %219 = vmatpush1.msra.mxu0 %v161
    %220 = vmatprep.subr.mxu0 0.0
    %221 = vmatpush1.msra.mxu0 %v160
    %222 = vmatprep.subr.mxu0 0.0
    %223 = vmatpush1.msra.mxu0 %v159
    %224 = vmatprep.subr.mxu0 0.0
    %225 = vmatpush1.msra.mxu0 %v158
    %226 = vmatprep.subr.mxu0 0.0
    %227 = vmatpush1.msra.mxu0 %v157
    %228 = vmatprep.subr.mxu0 0.0
    %229 = vmatpush2.msra.mxu0 %v188
    %230 = vmatprep.subr.mxu0 0.0
    %231 = vmatpush2.msra.mxu0 %v187
    %232 = vmatprep.subr.mxu0 0.0
    %233 = vmatpush2.msra.mxu0 %v186
    %234 = vmatprep.subr.mxu0 0.0
    %235 = vmatpush2.msra.mxu0 %v185
    %236 = vmatprep.subr.mxu0 0.0
    %237 = vmatpush2.msra.mxu0 %v184
    %238 = vmatprep.subr.mxu0 0.0
    %239 = vmatpush2.msra.mxu0 %v183
    %240 = vmatprep.subr.mxu0 0.0
    %241 = vmatpush2.msra.mxu0 %v182
    %242 = vmatprep.subr.mxu0 0.0
    %243 = vmatpush2.msra.mxu0 %v181
    %244 = vmatprep.subr.mxu0 0.0
    %245 = vmatpush2.msra.mxu0 %v180
    %246 = vmatprep.subr.mxu0 0.0
    %247 = vmatpush2.msra.mxu0 %v179
    %248 = vmatprep.subr.mxu0 0.0
    %249 = vmatpush2.msra.mxu0 %v178
    %250 = vmatprep.subr.mxu0 0.0
    %251 = vmatpush2.msra.mxu0 %v177
    %252 = vmatprep.subr.mxu0 0.0
    %253 = vmatpush2.msra.mxu0 %v176
    %254 = vmatprep.subr.mxu0 0.0
    %255 = vmatpush2.msra.mxu0 %v175
    %256 = vmatprep.subr.mxu0 0.0
    %257 = vmatpush2.msra.mxu0 %v174
    %258 = vmatprep.subr.mxu0 0.0
    %259 = vmatpush2.msra.mxu0 %v173
    %260 = vmatprep.mubr.f32.mxu0 %v156
    %261 = vmatmul.mubr.f32.gmra.mxu0 %v155
    %v262 = vpop.f32.mrf.mxu0
    %v263 = vadd.f32 %v194, %v262
    %v264 = vpop.f32.mrf.mxu0
    %265 = vdwg.mxu0
    %v266 = vmax.f32 %v263, 0.0
    %267 = vst [vmem:[%s5] sm:$0xff] %v266
    // Predicated region
    $region34: #{relu2_forward.1} parent=1 // pred_check
      _
    $region35: #{relu2_forward.1} parent=1 // pred_check_branch
      %269 = sbr.rel (0) target = $region37
    $region36: #{relu2_forward.1} parent=1 // pred_region
      _
    $region37: #{relu2_forward.1} parent=1 // pred_fallthru
      _
    // Predicated region
    $region38: #{relu2_forward.1} parent=1 // pred_check
      _
    $region39: #{relu2_forward.1} parent=1 // pred_check_branch
      %271 = sbr.rel (0) target = $region41
    $region40: #{relu2_forward.1} parent=1 // pred_region
      _
    $region41: #{relu2_forward.1} parent=1 // pred_fallthru
      _
    %272 = vsyncpa [#allocation3], 1
    %273 = vsyncpa [#allocation5], 1

</llo_original>
